<compile_context>
chip_gen: v7x
topology: tpu7x:2x2x1
jax: 0.10.0
libtpu: 0.0.40
codegen_flags: <defaults>
</compile_context>

<pallas_src>
import jax
import jax.numpy as jnp
from jax import lax
from jax.experimental import pallas as pl
from jax.experimental.pallas import tpu as pltpu

HIDDEN = 64          # feature width of the PyTorch module
PACKED = 2 * HIDDEN  # two rows per 128-lane vreg row
LN_EPS = 1e-5


def _not_parallel_linears_kernel(x_ref, w1_ref, w2_ref, avg_ref, p_ref, o_ref):
    """Fused fc1 -> LayerNorm -> ReLU -> fc2 -> residual on packed rows."""
    x32 = x_ref[...].astype(jnp.float32)            # (tp, 128) f32 for residual
    x_bf = x_ref[...].astype(jnp.bfloat16)          # MXU operand

    params = p_ref[...]                             # (4, 128) f32
    b1 = params[0:1, :]
    b2 = params[1:2, :]
    gamma = params[2:3, :]
    beta = params[3:4, :]

    # fc1: bf16 operands, f32 accumulation, block-diagonal diag(W1^T, W1^T).
    y = jnp.dot(x_bf, w1_ref[...], preferred_element_type=jnp.float32) + b1

    # LayerNorm over each 64-lane half.  Reductions run on the MXU via a
    # block-diagonal ones/64 averaging matrix (bf16 -> single-pass matmul,
    # f32 accumulation).  var = E[y^2] - mean^2 keeps the two reduction
    # matmuls independent (no mean -> d -> var serial MXU chain).
    avg = avg_ref[...]                              # (128, 128) bf16
    mean = jnp.dot(y.astype(jnp.bfloat16), avg,
                   preferred_element_type=jnp.float32)
    msq = jnp.dot((y * y).astype(jnp.bfloat16), avg,
                  preferred_element_type=jnp.float32)
    var = jnp.maximum(msq - mean * mean, 0.0)       # clamp bf16-rounding negatives
    yn = (y - mean) * lax.rsqrt(var + LN_EPS) * gamma + beta

    # ReLU (f32 VPU — works on all generations incl. v5e)
    yr = jnp.maximum(yn, 0.0)

    # fc2 (bf16-in / f32-acc block-diagonal), then residual in f32.
    z = jnp.dot(yr.astype(jnp.bfloat16), w2_ref[...],
                preferred_element_type=jnp.float32) + b2
    o_ref[...] = (x32 + z).astype(o_ref.dtype)


def _prepare(w1, b1, w2, b2, gamma, beta):
    """One-time packing of module parameters for the kernel."""
    f32 = jnp.float32
    bf = jnp.bfloat16
    z64 = jnp.zeros((HIDDEN, HIDDEN), f32)
    w1t = w1.T.astype(f32)
    w2t = w2.T.astype(f32)
    w1_bd = jnp.block([[w1t, z64], [z64, w1t]]).astype(bf)
    w2_bd = jnp.block([[w2t, z64], [z64, w2t]]).astype(bf)
    a64 = jnp.full((HIDDEN, HIDDEN), 1.0 / HIDDEN, f32)
    avg_bd = jnp.block([[a64, z64], [z64, a64]]).astype(bf)   # 1/64 exact in bf16

    # All small vector parameters in one array: a single constant-index DMA.
    params = jnp.stack([
        jnp.tile(b1.astype(f32), 2),
        jnp.tile(b2.astype(f32), 2),
        jnp.tile(gamma.astype(f32), 2),
        jnp.tile(beta.astype(f32), 2),
    ])                                                        # (4, 128)
    return w1_bd, w2_bd, avg_bd, params


def _tile_rows(n_packed, tm):
    """Packed-row tile: multiple of 8, capped at tm, aiming for >=2 grid steps
    (so the 'parallel' axis can shard across v7x's two TensorCores)."""
    half = (n_packed + 1) // 2
    tp = ((half + 7) // 8) * 8
    return max(8, min(tm, tp))


def _forward(x, prepared, *, tm=2048):
    w1_bd, w2_bd, avg_bd, params = prepared
    orig_shape = x.shape
    xf = x.reshape(-1, HIDDEN)
    n = xf.shape[0]

    # Only an odd row count needs a 1-row pad (packing needs an even count).
    # Partial last grid blocks are handled by Pallas masking — no whole-array
    # jnp.pad / [:n] slice around the kernel.
    n_even = n + (n % 2)
    if n_even != n:
        xf = jnp.concatenate([xf, jnp.zeros((1, HIDDEN), xf.dtype)], axis=0)
    n_packed = n_even // 2
    xp = xf.reshape(n_packed, PACKED)

    tp = _tile_rows(n_packed, tm)
    grid = ((n_packed + tp - 1) // tp,)
    const = lambda i: (0, 0)

    out = pl.pallas_call(
        _not_parallel_linears_kernel,
        out_shape=jax.ShapeDtypeStruct((n_packed, PACKED), x.dtype),
        grid_spec=pltpu.PrefetchScalarGridSpec(
            num_scalar_prefetch=0,
            grid=grid,
            in_specs=[
                pl.BlockSpec((tp, PACKED), lambda i: (i, 0)),   # packed x rows
                pl.BlockSpec((PACKED, PACKED), const),          # diag(W1^T, W1^T) bf16
                pl.BlockSpec((PACKED, PACKED), const),          # diag(W2^T, W2^T) bf16
                pl.BlockSpec((PACKED, PACKED), const),          # LN averaging matrix bf16
                pl.BlockSpec((4, PACKED), const),               # b1/b2/gamma/beta f32
            ],
            out_specs=pl.BlockSpec((tp, PACKED), lambda i: (i, 0)),
        ),
        compiler_params=pltpu.CompilerParams(
            dimension_semantics=("parallel",),       # row axis shards across TCs (v7x)
            vmem_limit_bytes=32 * 1024 * 1024,       # safe on v5e/v6e/v7x
        ),
    )(xp, w1_bd, w2_bd, avg_bd, params)

    out = out.reshape(n_even, HIDDEN)
    if n_even != n:
        out = out[:n]
    return out.reshape(orig_shape)


def make_not_parallel_linears(w1, b1, w2, b2, gamma, beta, *, tm=2048):
    """Prepare packed weights once; return a jitted forward fn over x."""
    prepared = _prepare(w1, b1, w2, b2, gamma, beta)

    @jax.jit
    def fwd(x):
        return _forward(x, prepared, tm=tm)

    return fwd


def not_parallel_linears(x, w1, b1, w2, b2, gamma, beta, *, tm=2048):
    """One-shot convenience wrapper (weight prep done inline)."""
    return _forward(x, _prepare(w1, b1, w2, b2, gamma, beta), tm=tm)


def _reference_f32(x, w1, b1, w2, b2, gamma, beta):
    y = x @ w1.T + b1
    mean = jnp.mean(y, axis=-1, keepdims=True)
    var = jnp.mean((y - mean) ** 2, axis=-1, keepdims=True)
    y = (y - mean) / jnp.sqrt(var + LN_EPS) * gamma + beta
    y = jnp.maximum(y, 0.0)
    z = y @ w2.T + b2
    return x + z


def _reference_bf16_mxu(x, w1, b1, w2, b2, gamma, beta):
    # Mirrors kernel numerics: bf16 matmul operands (incl. LN reductions),
    # f32 accumulation, var = E[y^2] - mean^2.
    bf = jnp.bfloat16
    y = jnp.dot(x.astype(bf), w1.T.astype(bf),
                preferred_element_type=jnp.float32) + b1
    mean = jnp.mean(y.astype(bf).astype(jnp.float32), axis=-1, keepdims=True)
    msq = jnp.mean((y * y).astype(bf).astype(jnp.float32), axis=-1, keepdims=True)
    var = jnp.maximum(msq - mean * mean, 0.0)
    y = (y - mean) * lax.rsqrt(var + LN_EPS) * gamma + beta
    y = jnp.maximum(y, 0.0)
    z = jnp.dot(y.astype(bf), w2.T.astype(bf),
                preferred_element_type=jnp.float32) + b2
    return x + z


if __name__ == "__main__":
    key = jax.random.PRNGKey(0)
    k_x, k_w1, k_b1, k_w2, k_b2 = jax.random.split(key, 5)

    batch, seq = 2, 8
    x = jax.random.normal(k_x, (batch, seq, HIDDEN), dtype=jnp.float32)

    # Deterministic parameter init (PyTorch-like uniform fan-in scaling).
    bound = 1.0 / (HIDDEN ** 0.5)
    w1 = jax.random.uniform(k_w1, (HIDDEN, HIDDEN), jnp.float32, -bound, bound)
    b1 = jax.random.uniform(k_b1, (HIDDEN,), jnp.float32, -bound, bound)
    w2 = jax.random.uniform(k_w2, (HIDDEN, HIDDEN), jnp.float32, -bound, bound)
    b2 = jax.random.uniform(k_b2, (HIDDEN,), jnp.float32, -bound, bound)
    gamma = jnp.ones((HIDDEN,), jnp.float32)   # LayerNorm default init
    beta = jnp.zeros((HIDDEN,), jnp.float32)

    fwd = make_not_parallel_linears(w1, b1, w2, b2, gamma, beta)
    out = jax.block_until_ready(fwd(x))
    assert out.shape == x.shape and out.dtype == x.dtype

    # Tight check: reference that does the same bf16-operand MXU math.
    ref_bf = _reference_bf16_mxu(x, w1, b1, w2, b2, gamma, beta)
    assert jnp.allclose(out, ref_bf, atol=5e-3, rtol=5e-3), \
        "mismatch vs bf16-matched reference"

    # Looser check against exact f32 PyTorch semantics (slack covers bf16
    # rounding of MXU operands only).
    ref = _reference_f32(x, w1, b1, w2, b2, gamma, beta)
    assert jnp.allclose(out, ref, atol=3e-2, rtol=3e-2), \
        "mismatch vs f32 reference"

    # Odd row count + non-divisible grid (exercises the 1-row fix-up and the
    # Pallas-masked partial last block with a tiny tile).
    x2 = jax.random.normal(jax.random.PRNGKey(1), (3, 5, HIDDEN), jnp.float32)
    out2 = jax.block_until_ready(
        not_parallel_linears(x2, w1, b1, w2, b2, gamma, beta, tm=8))
    ref2 = _reference_f32(x2, w1, b1, w2, b2, gamma, beta)
    assert out2.shape == x2.shape
    assert jnp.allclose(out2, ref2, atol=3e-2, rtol=3e-2), \
        "mismatch on odd-row / partial-block case"

    print("KERNEL_OK")
</pallas_src>

<mosaic_0001>
module attributes {stable_mosaic.version = 11 : i64} {
  func.func @_not_parallel_linears_kernel(%arg0: i32, %arg1: memref<8x128xf32, #tpu.memory_space<vmem>>, %arg2: memref<128x128xbf16, #tpu.memory_space<vmem>>, %arg3: memref<128x128xbf16, #tpu.memory_space<vmem>>, %arg4: memref<128x128xbf16, #tpu.memory_space<vmem>>, %arg5: memref<4x128xf32, #tpu.memory_space<vmem>>, %arg6: memref<8x128xf32, #tpu.memory_space<vmem>>) attributes {dimension_semantics = [#tpu.dimension_semantics<parallel>], iteration_bounds = array<i64: 1>, scalar_prefetch = 0 : i64, scratch_operands = 0 : i64, tpu.core_type = #tpu.core_type<tc>, window_params = [{transform_indices = @transform_0, window_bounds = array<i64: 8, 128>}, {pipeline_mode = #tpu.pipeline_mode<synchronous>, transform_indices = @transform_1, window_bounds = array<i64: 128, 128>}, {pipeline_mode = #tpu.pipeline_mode<synchronous>, transform_indices = @transform_2, window_bounds = array<i64: 128, 128>}, {pipeline_mode = #tpu.pipeline_mode<synchronous>, transform_indices = @transform_3, window_bounds = array<i64: 128, 128>}, {pipeline_mode = #tpu.pipeline_mode<synchronous>, transform_indices = @transform_4, window_bounds = array<i64: 4, 128>}, {transform_indices = @transform_5, window_bounds = array<i64: 8, 128>}]} {
    %c0 = arith.constant 0 : index
    %c0_0 = arith.constant 0 : index
    %0 = vector.load %arg1[%c0, %c0_0] : memref<8x128xf32, #tpu.memory_space<vmem>>, vector<8x128xf32>
    %c0_1 = arith.constant 0 : index
    %c0_2 = arith.constant 0 : index
    %1 = vector.load %arg1[%c0_1, %c0_2] : memref<8x128xf32, #tpu.memory_space<vmem>>, vector<8x128xf32>
    %2 = arith.truncf %1 : vector<8x128xf32> to vector<8x128xbf16>
    %c0_3 = arith.constant 0 : index
    %c0_4 = arith.constant 0 : index
    %3 = vector.load %arg5[%c0_3, %c0_4] : memref<4x128xf32, #tpu.memory_space<vmem>>, vector<4x128xf32>
    %4 = vector.extract_strided_slice %3 {offsets = [0, 0], sizes = [1, 128], strides = [1, 1]} : vector<4x128xf32> to vector<1x128xf32>
    %5 = vector.extract_strided_slice %3 {offsets = [1, 0], sizes = [1, 128], strides = [1, 1]} : vector<4x128xf32> to vector<1x128xf32>
    %6 = vector.extract_strided_slice %3 {offsets = [2, 0], sizes = [1, 128], strides = [1, 1]} : vector<4x128xf32> to vector<1x128xf32>
    %7 = vector.extract_strided_slice %3 {offsets = [3, 0], sizes = [1, 128], strides = [1, 1]} : vector<4x128xf32> to vector<1x128xf32>
    %c0_5 = arith.constant 0 : index
    %c0_6 = arith.constant 0 : index
    %8 = vector.load %arg2[%c0_5, %c0_6] : memref<128x128xbf16, #tpu.memory_space<vmem>>, vector<128x128xbf16>
    %cst = arith.constant dense<0.000000e+00> : vector<8x128xf32>
    %9 = tpu.matmul %2, %8, %cst {dimension_numbers = #tpu.dot_dimension_numbers<[1], [0], [0], [1], [0, 0, 1, 1], [], []>} : vector<8x128xbf16>, vector<128x128xbf16>, vector<8x128xf32> -> vector<8x128xf32>
    %10 = vector.broadcast %4 : vector<1x128xf32> to vector<8x128xf32>
    %11 = arith.addf %9, %10 : vector<8x128xf32>
    %c0_7 = arith.constant 0 : index
    %c0_8 = arith.constant 0 : index
    %12 = vector.load %arg4[%c0_7, %c0_8] : memref<128x128xbf16, #tpu.memory_space<vmem>>, vector<128x128xbf16>
    %13 = arith.truncf %11 : vector<8x128xf32> to vector<8x128xbf16>
    %cst_9 = arith.constant dense<0.000000e+00> : vector<8x128xf32>
    %14 = tpu.matmul %13, %12, %cst_9 {dimension_numbers = #tpu.dot_dimension_numbers<[1], [0], [0], [1], [0, 0, 1, 1], [], []>} : vector<8x128xbf16>, vector<128x128xbf16>, vector<8x128xf32> -> vector<8x128xf32>
    %15 = arith.mulf %11, %11 : vector<8x128xf32>
    %16 = arith.truncf %15 : vector<8x128xf32> to vector<8x128xbf16>
    %cst_10 = arith.constant dense<0.000000e+00> : vector<8x128xf32>
    %17 = tpu.matmul %16, %12, %cst_10 {dimension_numbers = #tpu.dot_dimension_numbers<[1], [0], [0], [1], [0, 0, 1, 1], [], []>} : vector<8x128xbf16>, vector<128x128xbf16>, vector<8x128xf32> -> vector<8x128xf32>
    %18 = arith.mulf %14, %14 : vector<8x128xf32>
    %19 = arith.subf %17, %18 : vector<8x128xf32>
    %cst_11 = arith.constant 0.000000e+00 : f32
    %20 = vector.broadcast %cst_11 : f32 to vector<8x128xf32>
    %21 = arith.maximumf %19, %20 : vector<8x128xf32>
    %22 = arith.subf %11, %14 : vector<8x128xf32>
    %cst_12 = arith.constant 9.99999974E-6 : f32
    %23 = vector.broadcast %cst_12 : f32 to vector<8x128xf32>
    %24 = arith.addf %21, %23 : vector<8x128xf32>
    %25 = math.rsqrt %24 : vector<8x128xf32>
    %26 = arith.mulf %22, %25 : vector<8x128xf32>
    %27 = vector.broadcast %6 : vector<1x128xf32> to vector<8x128xf32>
    %28 = arith.mulf %26, %27 : vector<8x128xf32>
    %29 = vector.broadcast %7 : vector<1x128xf32> to vector<8x128xf32>
    %30 = arith.addf %28, %29 : vector<8x128xf32>
    %cst_13 = arith.constant 0.000000e+00 : f32
    %31 = vector.broadcast %cst_13 : f32 to vector<8x128xf32>
    %32 = arith.maximumf %30, %31 : vector<8x128xf32>
    %33 = arith.truncf %32 : vector<8x128xf32> to vector<8x128xbf16>
    %c0_14 = arith.constant 0 : index
    %c0_15 = arith.constant 0 : index
    %34 = vector.load %arg3[%c0_14, %c0_15] : memref<128x128xbf16, #tpu.memory_space<vmem>>, vector<128x128xbf16>
    %cst_16 = arith.constant dense<0.000000e+00> : vector<8x128xf32>
    %35 = tpu.matmul %33, %34, %cst_16 {dimension_numbers = #tpu.dot_dimension_numbers<[1], [0], [0], [1], [0, 0, 1, 1], [], []>} : vector<8x128xbf16>, vector<128x128xbf16>, vector<8x128xf32> -> vector<8x128xf32>
    %36 = vector.broadcast %5 : vector<1x128xf32> to vector<8x128xf32>
    %37 = arith.addf %35, %36 : vector<8x128xf32>
    %38 = arith.addf %0, %37 : vector<8x128xf32>
    %c0_17 = arith.constant 0 : index
    %c0_18 = arith.constant 0 : index
    %39 = vector.load %arg6[%c0_17, %c0_18] : memref<8x128xf32, #tpu.memory_space<vmem>>, vector<8x128xf32>
    tpu.vector_store %arg6[%c0_17, %c0_18], %38 {strides = array<i32>} : memref<8x128xf32, #tpu.memory_space<vmem>>, vector<8x128xf32>,
    return
  }
  func.func @transform_0(%arg0: i32) -> (i32, i32) {
    %c0_i32 = arith.constant 0 : i32
    %c0_i32_0 = arith.constant 0 : i32
    return %arg0, %c0_i32 : i32, i32
  }
  func.func @transform_1(%arg0: i32) -> (i32, i32) {
    %c0_i32 = arith.constant 0 : i32
    %c0_i32_0 = arith.constant 0 : i32
    %c0_i32_1 = arith.constant 0 : i32
    return %c0_i32, %c0_i32_0 : i32, i32
  }
  func.func @transform_2(%arg0: i32) -> (i32, i32) {
    %c0_i32 = arith.constant 0 : i32
    %c0_i32_0 = arith.constant 0 : i32
    %c0_i32_1 = arith.constant 0 : i32
    return %c0_i32, %c0_i32_0 : i32, i32
  }
  func.func @transform_3(%arg0: i32) -> (i32, i32) {
    %c0_i32 = arith.constant 0 : i32
    %c0_i32_0 = arith.constant 0 : i32
    %c0_i32_1 = arith.constant 0 : i32
    return %c0_i32, %c0_i32_0 : i32, i32
  }
  func.func @transform_4(%arg0: i32) -> (i32, i32) {
    %c0_i32 = arith.constant 0 : i32
    %c0_i32_0 = arith.constant 0 : i32
    %c0_i32_1 = arith.constant 0 : i32
    return %c0_i32, %c0_i32_0 : i32, i32
  }
  func.func @transform_5(%arg0: i32) -> (i32, i32) {
    %c0_i32 = arith.constant 0 : i32
    %c0_i32_0 = arith.constant 0 : i32
    return %arg0, %c0_i32 : i32, i32
  }
}

</mosaic_0001>

<llo_original>
// kernel: fwd.1
$region0: #{fwd.1}
  #allocation0 [shape = 'u32[]', space=smem, size = 0x4, offset = 0x4, fixed_abs, tag = 'smem constant byte address 0x4 - core index']
  #allocation1 [shape = 'u32[144,128]{1,0:T(1,128)}', space=vmem, size = 0x12000, scoped, tag = 'internal scratch']
  %s0 = inlined_call_operand.vmem [shape: f32[8,128], index: 0, kind: input, shape index: {}]
  %s1 = inlined_call_operand.hbm [shape: bf16[128,128], index: 1, kind: input, shape index: {}]
  %s2 = inlined_call_operand.hbm [shape: bf16[128,128], index: 2, kind: input, shape index: {}]
  %s3 = inlined_call_operand.hbm [shape: bf16[128,128], index: 3, kind: input, shape index: {}]
  %s4 = inlined_call_operand.vmem [shape: f32[4,128], index: 4, kind: input, shape index: {}]
  %s5 = inlined_call_operand.vmem [shape: f32[8,128], index: 5, kind: output, shape index: {}]
  %s6 = sld [smem:[#allocation0]]
  $region42: #{fwd.1} parent=0
    _
  %s8 = ssub.s32 1, %s6
  %s9 = scalar_select 0, %s8, %s6
  $region1: #{fwd.1} parent=0
    #allocation2 [shape = 'u8[32768]{0}', space=vmem, size = 0x8000, scoped, tag = 'input window, operand 1, single buffered']
    #allocation3 [shape = 's32[1]{0}', space=sflag, size = 0x4, scoped, tag = 'scoped memory for fwd.1']
    #allocation4 [shape = 'u8[32768]{0}', space=vmem, size = 0x8000, scoped, tag = 'input window, operand 2, single buffered']
    #allocation5 [shape = 's32[1]{0}', space=sflag, size = 0x4, scoped, tag = 'scoped memory for fwd.1']
    #allocation6 [shape = 'u8[32768]{0}', space=vmem, size = 0x8000, scoped, tag = 'input window, operand 3, single buffered']
    %10 = vsyncpa [#allocation3], 0
    %11 = vsyncpa [#allocation5], 0
    // Predicated region
    $region2: #{fwd.1} parent=1 // pred_check
      _
    $region3: #{fwd.1} parent=1 // pred_check_branch
      %13 = sbr.rel (0) target = $region5
    $region4: #{fwd.1} parent=1 // pred_region
      _
    $region5: #{fwd.1} parent=1 // pred_fallthru
      _
    // Predicated region
    $region6: #{fwd.1} parent=1 // pred_check
      _
    $region7: #{fwd.1} parent=1 // pred_check_branch
      %15 = sbr.rel (0) target = $region9
    $region8: #{fwd.1} parent=1 // pred_region
      %s17 = ssub.s32 1024, 1024
      %18 = vsyncadd [#allocation3], %s17
      %s19 = sshll.u32 [#allocation2], 4
      %s20 = int_to_ptr.vmem [resolvable:$true] %s19
      %25 = dma.hbm_to_vmem [thread:$0]  %s1, 1024, %s20, [#allocation3], 64, 64, 4
    $region9: #{fwd.1} parent=1 // pred_fallthru
      _
    // Predicated region
    $region10: #{fwd.1} parent=1 // pred_check
      _
    $region11: #{fwd.1} parent=1 // pred_check_branch
      %27 = sbr.rel (0) target = $region13
    $region12: #{fwd.1} parent=1 // pred_region
      %s29 = ssub.s32 1024, 1024
      %30 = vsyncadd [#allocation5], %s29
      %s31 = sshll.u32 [#allocation4], 4
      %s32 = int_to_ptr.vmem [resolvable:$true] %s31
      %37 = dma.hbm_to_vmem [thread:$0]  %s2, 1024, %s32, [#allocation5], 64, 64, 4
    $region13: #{fwd.1} parent=1 // pred_fallthru
      _
    // Predicated region
    $region14: #{fwd.1} parent=1 // pred_check
      _
    $region15: #{fwd.1} parent=1 // pred_check_branch
      %39 = sbr.rel (0) target = $region17
    $region16: #{fwd.1} parent=1 // pred_region
      %s41 = ssub.s32 1024, 1024
      %42 = vsyncadd [#allocation5], %s41
      %s43 = sshll.u32 [#allocation6], 4
      %s44 = int_to_ptr.vmem [resolvable:$true] %s43
      %49 = dma.hbm_to_vmem [thread:$0]  %s3, 1024, %s44, [#allocation5], 64, 64, 4
    $region17: #{fwd.1} parent=1 // pred_fallthru
      _
    // Predicated region
    $region18: #{fwd.1} parent=1 // pred_check
      _
    $region19: #{fwd.1} parent=1 // pred_check_branch
      %51 = sbr.rel (0) target = $region21
    $region20: #{fwd.1} parent=1 // pred_region
      _
    $region21: #{fwd.1} parent=1 // pred_fallthru
      _
    // Predicated region
    $region22: #{fwd.1} parent=1 // pred_check
      _
    $region23: #{fwd.1} parent=1 // pred_check_branch
      %53 = sbr.rel (0) target = $region25
    $region24: #{fwd.1} parent=1 // pred_region
      %54 = dma.done [#allocation3], 1024
    $region25: #{fwd.1} parent=1 // pred_fallthru
      _
    // Predicated region
    $region26: #{fwd.1} parent=1 // pred_check
      _
    $region27: #{fwd.1} parent=1 // pred_check_branch
      %56 = sbr.rel (0) target = $region29
    $region28: #{fwd.1} parent=1 // pred_region
      %57 = dma.done [#allocation5], 1024
    $region29: #{fwd.1} parent=1 // pred_fallthru
      _
    // Predicated region
    $region30: #{fwd.1} parent=1 // pred_check
      _
    $region31: #{fwd.1} parent=1 // pred_check_branch
      %59 = sbr.rel (0) target = $region33
    $region32: #{fwd.1} parent=1 // pred_region
      %60 = dma.done [#allocation5], 1024
    $region33: #{fwd.1} parent=1 // pred_fallthru
      _
    %v62 = vld [vmem:[%s0] sm:$0xff]
    %v63 = vpack.c.bf16 %v62, %v62
    %v64 = vld [vmem:[%s4] sm:$0xf]
    %v65 = vld [vmem:[#allocation2] sm:$0xf]
    %v66 = vld [vmem:[#allocation2 + $0x4] sm:$0xf]
    %v67 = vld [vmem:[#allocation2 + $0x8] sm:$0xf]
    %v68 = vld [vmem:[#allocation2 + $0xc] sm:$0xf]
    %v69 = vld [vmem:[#allocation2 + $0x10] sm:$0xf]
    %v70 = vld [vmem:[#allocation2 + $0x14] sm:$0xf]
    %v71 = vld [vmem:[#allocation2 + $0x18] sm:$0xf]
    %v72 = vld [vmem:[#allocation2 + $0x1c] sm:$0xf]
    %v73 = vld [vmem:[#allocation2 + $0x20] sm:$0xf]
    %v74 = vld [vmem:[#allocation2 + $0x24] sm:$0xf]
    %v75 = vld [vmem:[#allocation2 + $0x28] sm:$0xf]
    %v76 = vld [vmem:[#allocation2 + $0x2c] sm:$0xf]
    %v77 = vld [vmem:[#allocation2 + $0x30] sm:$0xf]
    %v78 = vld [vmem:[#allocation2 + $0x34] sm:$0xf]
    %v79 = vld [vmem:[#allocation2 + $0x38] sm:$0xf]
    %v80 = vld [vmem:[#allocation2 + $0x3c] sm:$0xf]
    %v81 = vlaneseq
    %v82 = vshrl.u32 %v81, 7
    %v83 = vsub.s32 0, %v82
    %v84 = vrot.slane %v64, %v83
    %v101 = vunpack.c.l.b16 %v65
    %v102 = vunpack.c.l.b16 %v66
    %v103 = vunpack.c.l.b16 %v67
    %v104 = vunpack.c.l.b16 %v68
    %v105 = vunpack.c.l.b16 %v69
    %v106 = vunpack.c.l.b16 %v70
    %v107 = vunpack.c.l.b16 %v71
    %v108 = vunpack.c.l.b16 %v72
    %v109 = vunpack.c.l.b16 %v73
    %v110 = vunpack.c.l.b16 %v74
    %v111 = vunpack.c.l.b16 %v75
    %v112 = vunpack.c.l.b16 %v76
    %v113 = vunpack.c.l.b16 %v77
    %v114 = vunpack.c.l.b16 %v78
    %v115 = vunpack.c.l.b16 %v79
    %v116 = vunpack.c.l.b16 %v80
    %v117 = vpack.c.b16 %v102, %v101
    %v118 = vpack.c.b16 %v104, %v103
    %v119 = vpack.c.b16 %v106, %v105
    %v120 = vpack.c.b16 %v108, %v107
    %v121 = vpack.c.b16 %v110, %v109
    %v122 = vpack.c.b16 %v112, %v111
    %v123 = vpack.c.b16 %v114, %v113
    %v124 = vpack.c.b16 %v116, %v115
    %133 = vmatprep.subr.bf16.mxu0 0
    %134 = vmatpush1.bf16.msra.mxu0 %v117
    %135 = vmatprep.subr.bf16.mxu0 0
    %136 = vmatpush1.bf16.msra.mxu0 %v118
    %137 = vmatprep.subr.bf16.mxu0 0
    %138 = vmatpush1.bf16.msra.mxu0 %v119
    %139 = vmatprep.subr.bf16.mxu0 0
    %140 = vmatpush1.bf16.msra.mxu0 %v120
    %141 = vmatprep.subr.bf16.mxu0 0
    %142 = vmatpush1.bf16.msra.mxu0 %v121
    %143 = vmatprep.subr.bf16.mxu0 0
    %144 = vmatpush1.bf16.msra.mxu0 %v122
    %145 = vmatprep.subr.bf16.mxu0 0
    %146 = vmatpush1.bf16.msra.mxu0 %v123
    %147 = vmatprep.subr.bf16.mxu0 0
    %148 = vmatpush1.bf16.msra.mxu0 %v124
    %149 = vmatprep.subr.bf16.mxu0 0
    %150 = vmatpush1.bf16.msra.mxu0 0
    %151 = vmatprep.subr.bf16.mxu0 0
    %152 = vmatpush1.bf16.msra.mxu0 0
    %153 = vmatprep.subr.bf16.mxu0 0
    %154 = vmatpush1.bf16.msra.mxu0 0
    %155 = vmatprep.subr.bf16.mxu0 0
    %156 = vmatpush1.bf16.msra.mxu0 0
    %157 = vmatprep.subr.bf16.mxu0 0
    %158 = vmatpush1.bf16.msra.mxu0 0
    %159 = vmatprep.subr.bf16.mxu0 0
    %160 = vmatpush1.bf16.msra.mxu0 0
    %161 = vmatprep.subr.bf16.mxu0 0
    %162 = vmatpush1.bf16.msra.mxu0 0
    %163 = vmatprep.subr.bf16.mxu0 0
    %164 = vmatpush1.bf16.msra.mxu0 0
    %165 = vmatprep.mubr.bf16.mxu0 0
    %166 = vmatmul.mubr.bf16.gmra.mrb[0].mxu0 %v63
    %v167 = vpop.f32.mrb[0].mxu0
    %v168 = vadd.f32 %v84, %v167
    %v169 = vpop.f32.mrb[0].mxu0
    %v170 = vpop.f32.mrb[0].mxu0
    %v171 = vpop.f32.mrb[0].mxu0
    %172 = vdwg.mxu0
    %v173 = vld [vmem:[#allocation6] sm:$0xf]
    %v174 = vld [vmem:[#allocation6 + $0x4] sm:$0xf]
    %v175 = vld [vmem:[#allocation6 + $0x8] sm:$0xf]
    %v176 = vld [vmem:[#allocation6 + $0xc] sm:$0xf]
    %v177 = vld [vmem:[#allocation6 + $0x10] sm:$0xf]
    %v178 = vld [vmem:[#allocation6 + $0x14] sm:$0xf]
    %v179 = vld [vmem:[#allocation6 + $0x18] sm:$0xf]
    %v180 = vld [vmem:[#allocation6 + $0x1c] sm:$0xf]
    %v181 = vld [vmem:[#allocation6 + $0x20] sm:$0xf]
    %v182 = vld [vmem:[#allocation6 + $0x24] sm:$0xf]
    %v183 = vld [vmem:[#allocation6 + $0x28] sm:$0xf]
    %v184 = vld [vmem:[#allocation6 + $0x2c] sm:$0xf]
    %v185 = vld [vmem:[#allocation6 + $0x30] sm:$0xf]
    %v186 = vld [vmem:[#allocation6 + $0x34] sm:$0xf]
    %v187 = vld [vmem:[#allocation6 + $0x38] sm:$0xf]
    %v188 = vld [vmem:[#allocation6 + $0x3c] sm:$0xf]
    %v189 = vpack.c.bf16 %v168, %v168
    %v206 = vunpack.c.l.b16 %v173
    %v207 = vunpack.c.l.b16 %v174
    %v208 = vunpack.c.l.b16 %v175
    %v209 = vunpack.c.l.b16 %v176
    %v210 = vunpack.c.l.b16 %v177
    %v211 = vunpack.c.l.b16 %v178
    %v212 = vunpack.c.l.b16 %v179
    %v213 = vunpack.c.l.b16 %v180
    %v214 = vunpack.c.l.b16 %v181
    %v215 = vunpack.c.l.b16 %v182
    %v216 = vunpack.c.l.b16 %v183
    %v217 = vunpack.c.l.b16 %v184
    %v218 = vunpack.c.l.b16 %v185
    %v219 = vunpack.c.l.b16 %v186
    %v220 = vunpack.c.l.b16 %v187
    %v221 = vunpack.c.l.b16 %v188
    %v222 = vpack.c.b16 %v207, %v206
    %v223 = vpack.c.b16 %v209, %v208
    %v224 = vpack.c.b16 %v211, %v210
    %v225 = vpack.c.b16 %v213, %v212
    %v226 = vpack.c.b16 %v215, %v214
    %v227 = vpack.c.b16 %v217, %v216
    %v228 = vpack.c.b16 %v219, %v218
    %v229 = vpack.c.b16 %v221, %v220
    %238 = vmatprep.subr.bf16.mxu0 0
    %239 = vmatpush1.bf16.msra.mxu0 %v222
    %240 = vmatprep.subr.bf16.mxu0 0
    %241 = vmatpush1.bf16.msra.mxu0 %v223
    %242 = vmatprep.subr.bf16.mxu0 0
    %243 = vmatpush1.bf16.msra.mxu0 %v224
    %244 = vmatprep.subr.bf16.mxu0 0
    %245 = vmatpush1.bf16.msra.mxu0 %v225
    %246 = vmatprep.subr.bf16.mxu0 0
    %247 = vmatpush1.bf16.msra.mxu0 %v226
    %248 = vmatprep.subr.bf16.mxu0 0
    %249 = vmatpush1.bf16.msra.mxu0 %v227
    %250 = vmatprep.subr.bf16.mxu0 0
    %251 = vmatpush1.bf16.msra.mxu0 %v228
    %252 = vmatprep.subr.bf16.mxu0 0
    %253 = vmatpush1.bf16.msra.mxu0 %v229
    %254 = vmatprep.subr.bf16.mxu0 0
    %255 = vmatpush1.bf16.msra.mxu0 0
    %256 = vmatprep.subr.bf16.mxu0 0
    %257 = vmatpush1.bf16.msra.mxu0 0
    %258 = vmatprep.subr.bf16.mxu0 0
    %259 = vmatpush1.bf16.msra.mxu0 0
    %260 = vmatprep.subr.bf16.mxu0 0
    %261 = vmatpush1.bf16.msra.mxu0 0
    %262 = vmatprep.subr.bf16.mxu0 0
    %263 = vmatpush1.bf16.msra.mxu0 0
    %264 = vmatprep.subr.bf16.mxu0 0
    %265 = vmatpush1.bf16.msra.mxu0 0
    %266 = vmatprep.subr.bf16.mxu0 0
    %267 = vmatpush1.bf16.msra.mxu0 0
    %268 = vmatprep.subr.bf16.mxu0 0
    %269 = vmatpush1.bf16.msra.mxu0 0
    %270 = vmatprep.mubr.bf16.mxu0 0
    %271 = vmatmul.mubr.bf16.gmra.mrb[0].mxu0 %v189
    %v272 = vpop.f32.mrb[0].mxu0
    %v273 = vadd.f32 0.0, %v272
    %v274 = vpop.f32.mrb[0].mxu0
    %v275 = vpop.f32.mrb[0].mxu0
    %v276 = vpop.f32.mrb[0].mxu0
    %277 = vdwg.mxu0
    %v278 = vmul.f32 %v168, %v168
    %v279 = vpack.c.bf16 %v278, %v278
    %280 = vmatprep.subr.bf16.mxu0 0
    %281 = vmatpush1.bf16.msra.mxu0 %v222
    %282 = vmatprep.subr.bf16.mxu0 0
    %283 = vmatpush1.bf16.msra.mxu0 %v223
    %284 = vmatprep.subr.bf16.mxu0 0
    %285 = vmatpush1.bf16.msra.mxu0 %v224
    %286 = vmatprep.subr.bf16.mxu0 0
    %287 = vmatpush1.bf16.msra.mxu0 %v225
    %288 = vmatprep.subr.bf16.mxu0 0
    %289 = vmatpush1.bf16.msra.mxu0 %v226
    %290 = vmatprep.subr.bf16.mxu0 0
    %291 = vmatpush1.bf16.msra.mxu0 %v227
    %292 = vmatprep.subr.bf16.mxu0 0
    %293 = vmatpush1.bf16.msra.mxu0 %v228
    %294 = vmatprep.subr.bf16.mxu0 0
    %295 = vmatpush1.bf16.msra.mxu0 %v229
    %296 = vmatprep.subr.bf16.mxu0 0
    %297 = vmatpush1.bf16.msra.mxu0 0
    %298 = vmatprep.subr.bf16.mxu0 0
    %299 = vmatpush1.bf16.msra.mxu0 0
    %300 = vmatprep.subr.bf16.mxu0 0
    %301 = vmatpush1.bf16.msra.mxu0 0
    %302 = vmatprep.subr.bf16.mxu0 0
    %303 = vmatpush1.bf16.msra.mxu0 0
    %304 = vmatprep.subr.bf16.mxu0 0
    %305 = vmatpush1.bf16.msra.mxu0 0
    %306 = vmatprep.subr.bf16.mxu0 0
    %307 = vmatpush1.bf16.msra.mxu0 0
    %308 = vmatprep.subr.bf16.mxu0 0
    %309 = vmatpush1.bf16.msra.mxu0 0
    %310 = vmatprep.subr.bf16.mxu0 0
    %311 = vmatpush1.bf16.msra.mxu0 0
    %312 = vmatprep.mubr.bf16.mxu0 0
    %313 = vmatmul.mubr.bf16.gmra.mrb[0].mxu0 %v279
    %v314 = vpop.f32.mrb[0].mxu0
    %v315 = vadd.f32 0.0, %v314
    %v316 = vpop.f32.mrb[0].mxu0
    %v317 = vpop.f32.mrb[0].mxu0
    %v318 = vpop.f32.mrb[0].mxu0
    %319 = vdwg.mxu0
    %v320 = vmul.f32 %v273, %v273
    %v321 = vsub.f32 %v315, %v320
    %v322 = vmax.f32 %v321, 0.0
    %v323 = vsub.f32 %v168, %v273
    %v324 = vadd.f32 %v322, 1e-05
    %v325 = vrsqrt.pop %v324
    %v326 = vmul.f32 %v323, %v325
    %v327 = vlaneseq
    %v328 = vshrl.u32 %v327, 7
    %v329 = vsub.s32 2, %v328
    %v330 = vrot.slane %v64, %v329
    %v331 = vmul.f32 %v326, %v330
    %v332 = vlaneseq
    %v333 = vshrl.u32 %v332, 7
    %v334 = vsub.s32 3, %v333
    %v335 = vrot.slane %v64, %v334
    %v336 = vadd.f32 %v331, %v335
    %v337 = vmax.f32 %v336, 0.0
    %v338 = vpack.c.bf16 %v337, %v337
    %v339 = vld [vmem:[#allocation4] sm:$0xf]
    %v340 = vld [vmem:[#allocation4 + $0x4] sm:$0xf]
    %v341 = vld [vmem:[#allocation4 + $0x8] sm:$0xf]
    %v342 = vld [vmem:[#allocation4 + $0xc] sm:$0xf]
    %v343 = vld [vmem:[#allocation4 + $0x10] sm:$0xf]
    %v344 = vld [vmem:[#allocation4 + $0x14] sm:$0xf]
    %v345 = vld [vmem:[#allocation4 + $0x18] sm:$0xf]
    %v346 = vld [vmem:[#allocation4 + $0x1c] sm:$0xf]
    %v347 = vld [vmem:[#allocation4 + $0x20] sm:$0xf]
    %v348 = vld [vmem:[#allocation4 + $0x24] sm:$0xf]
    %v349 = vld [vmem:[#allocation4 + $0x28] sm:$0xf]
    %v350 = vld [vmem:[#allocation4 + $0x2c] sm:$0xf]
    %v351 = vld [vmem:[#allocation4 + $0x30] sm:$0xf]
    %v352 = vld [vmem:[#allocation4 + $0x34] sm:$0xf]
    %v353 = vld [vmem:[#allocation4 + $0x38] sm:$0xf]
    %v354 = vld [vmem:[#allocation4 + $0x3c] sm:$0xf]
    %v355 = vlaneseq
    %v356 = vshrl.u32 %v355, 7
    %v357 = vsub.s32 1, %v356
    %v358 = vrot.slane %v64, %v357
    %v375 = vunpack.c.l.b16 %v339
    %v376 = vunpack.c.l.b16 %v340
    %v377 = vunpack.c.l.b16 %v341
    %v378 = vunpack.c.l.b16 %v342
    %v379 = vunpack.c.l.b16 %v343
    %v380 = vunpack.c.l.b16 %v344
    %v381 = vunpack.c.l.b16 %v345
    %v382 = vunpack.c.l.b16 %v346
    %v383 = vunpack.c.l.b16 %v347
    %v384 = vunpack.c.l.b16 %v348
    %v385 = vunpack.c.l.b16 %v349
    %v386 = vunpack.c.l.b16 %v350
    %v387 = vunpack.c.l.b16 %v351
    %v388 = vunpack.c.l.b16 %v352
    %v389 = vunpack.c.l.b16 %v353
    %v390 = vunpack.c.l.b16 %v354
    %v391 = vpack.c.b16 %v376, %v375
    %v392 = vpack.c.b16 %v378, %v377
    %v393 = vpack.c.b16 %v380, %v379
    %v394 = vpack.c.b16 %v382, %v381
    %v395 = vpack.c.b16 %v384, %v383
    %v396 = vpack.c.b16 %v386, %v385
    %v397 = vpack.c.b16 %v388, %v387
    %v398 = vpack.c.b16 %v390, %v389
    %407 = vmatprep.subr.bf16.mxu0 0
    %408 = vmatpush1.bf16.msra.mxu0 %v391
    %409 = vmatprep.subr.bf16.mxu0 0
    %410 = vmatpush1.bf16.msra.mxu0 %v392
    %411 = vmatprep.subr.bf16.mxu0 0
    %412 = vmatpush1.bf16.msra.mxu0 %v393
    %413 = vmatprep.subr.bf16.mxu0 0
    %414 = vmatpush1.bf16.msra.mxu0 %v394
    %415 = vmatprep.subr.bf16.mxu0 0
    %416 = vmatpush1.bf16.msra.mxu0 %v395
    %417 = vmatprep.subr.bf16.mxu0 0
    %418 = vmatpush1.bf16.msra.mxu0 %v396
    %419 = vmatprep.subr.bf16.mxu0 0
    %420 = vmatpush1.bf16.msra.mxu0 %v397
    %421 = vmatprep.subr.bf16.mxu0 0
    %422 = vmatpush1.bf16.msra.mxu0 %v398
    %423 = vmatprep.subr.bf16.mxu0 0
    %424 = vmatpush1.bf16.msra.mxu0 0
    %425 = vmatprep.subr.bf16.mxu0 0
    %426 = vmatpush1.bf16.msra.mxu0 0
    %427 = vmatprep.subr.bf16.mxu0 0
    %428 = vmatpush1.bf16.msra.mxu0 0
    %429 = vmatprep.subr.bf16.mxu0 0
    %430 = vmatpush1.bf16.msra.mxu0 0
    %431 = vmatprep.subr.bf16.mxu0 0
    %432 = vmatpush1.bf16.msra.mxu0 0
    %433 = vmatprep.subr.bf16.mxu0 0
    %434 = vmatpush1.bf16.msra.mxu0 0
    %435 = vmatprep.subr.bf16.mxu0 0
    %436 = vmatpush1.bf16.msra.mxu0 0
    %437 = vmatprep.subr.bf16.mxu0 0
    %438 = vmatpush1.bf16.msra.mxu0 0
    %439 = vmatprep.mubr.bf16.mxu0 0
    %440 = vmatmul.mubr.bf16.gmra.mrb[0].mxu0 %v338
    %v441 = vpop.f32.mrb[0].mxu0
    %v442 = vadd.f32 %v358, %v441
    %v443 = vpop.f32.mrb[0].mxu0
    %v444 = vpop.f32.mrb[0].mxu0
    %v445 = vpop.f32.mrb[0].mxu0
    %446 = vdwg.mxu0
    %v447 = vadd.f32 %v62, %v442
    %448 = vst [vmem:[%s5] sm:$0xff] %v447
    // Predicated region
    $region34: #{fwd.1} parent=1 // pred_check
      _
    $region35: #{fwd.1} parent=1 // pred_check_branch
      %450 = sbr.rel (0) target = $region37
    $region36: #{fwd.1} parent=1 // pred_region
      _
    $region37: #{fwd.1} parent=1 // pred_fallthru
      _
    // Predicated region
    $region38: #{fwd.1} parent=1 // pred_check
      _
    $region39: #{fwd.1} parent=1 // pred_check_branch
      %452 = sbr.rel (0) target = $region41
    $region40: #{fwd.1} parent=1 // pred_region
      _
    $region41: #{fwd.1} parent=1 // pred_fallthru
      _
    %453 = vsyncpa [#allocation3], 1
    %454 = vsyncpa [#allocation5], 1

</llo_original>
